<compile_context>
chip_gen: v6e
topology: v6e:2x2x1
jax: 0.10.0
libtpu: 0.0.40
codegen_flags: <defaults>
</compile_context>

<pallas_src>
import jax
import jax.numpy as jnp
from jax.experimental import pallas as pl
from jax.experimental.pallas import tpu as pltpu


def _round_up(x, m):
    return (x + m - 1) // m * m


def _vmem_capacity_bytes():
    """Physical VMEM per core; conservative 64 MiB fallback if unqueryable."""
    try:
        info = pltpu.get_tpu_info()
        cap = getattr(info, "vmem_capacity_bytes", None)
        if cap:
            return int(cap)
    except Exception:
        pass
    return 64 << 20


def _num_tensorcores_heuristic(vmem_cap):
    # v7x: 2 TensorCores/chip, 64 MiB VMEM per core.  v5e/v6e: 1 TC, 128 MiB.
    # A wrong guess only changes which (correct) path we take.
    return 2 if vmem_cap <= (64 << 20) else 1


# --------------------------------------------------------------------------
# Shared tiny MLP: (C,1)x2 pooled stats -> per-channel gate scale (C,1) f32.
# Weights consumed in their native dtype (bf16 stays bf16); MXU accumulates
# in f32 via preferred_element_type.  Both MLP evaluations batched at N=2.
# --------------------------------------------------------------------------
def _mlp_scale(avg_p, max_p, w1_ref, w2_ref):
    col = jax.lax.broadcasted_iota(jnp.int32, (avg_p.shape[0], 2), 1)
    v = jnp.where(col == 0, avg_p, max_p)                              # (C, 2) f32
    w1 = w1_ref[...]                                                   # (Cr, C)
    w2 = w2_ref[...]                                                   # (C, Cr)
    h = jnp.maximum(
        jnp.dot(w1, v.astype(w1.dtype), preferred_element_type=jnp.float32), 0.0)
    y = jnp.dot(w2, h.astype(w2.dtype), preferred_element_type=jnp.float32)  # (C, 2)
    return 1.0 + jax.nn.sigmoid(y[:, 0:1] + y[:, 1:2])                 # (C, 1) f32


# --------------------------------------------------------------------------
# Path 1: fused single-pass kernel (per-batch full-HW block)
# --------------------------------------------------------------------------
def _make_fused_kernel(inv_hw):
    def kernel(x_ref, w1_ref, w2_ref, o_ref):
        x = x_ref[0]                                                   # (C, HW), native dtype
        sum_p = jnp.sum(x, axis=-1, keepdims=True, dtype=jnp.float32)  # (C, 1)
        max_p = jnp.max(x, axis=-1, keepdims=True).astype(jnp.float32) # (C, 1)
        scale = _mlp_scale(sum_p * inv_hw, max_p, w1_ref, w2_ref)      # (C, 1) f32
        # Precision decision: the gate is cast to x's dtype and the multiply
        # stays in x's dtype (exact for f32; one extra rounding for bf16 vs.
        # the f32-math reference).  Avoids a full-tile f32 upcast.
        o_ref[...] = (x * scale.astype(x.dtype))[None].astype(o_ref.dtype)
    return kernel


# --------------------------------------------------------------------------
# Path 2a: tiled pool + MLP  ->  scale (B, C, 1).  Ragged last HW tile.
# --------------------------------------------------------------------------
def _make_pool_mlp_kernel(hw_valid, hw_tile, needs_mask):
    inv_hw = 1.0 / hw_valid

    def kernel(x_ref, w1_ref, w2_ref, scale_ref, sum_sc, max_sc):
        j = pl.program_id(1)
        nj = pl.num_programs(1)

        @pl.when(j == 0)
        def _init():
            sum_sc[...] = jnp.zeros_like(sum_sc)
            max_sc[...] = jnp.full_like(max_sc, -jnp.inf)

        x = x_ref[0]                                                   # (C, T)

        def _accumulate_full():
            sum_sc[...] += jnp.sum(x, axis=-1, keepdims=True, dtype=jnp.float32)
            max_sc[...] = jnp.maximum(
                max_sc[...],
                jnp.max(x, axis=-1, keepdims=True).astype(jnp.float32))

        if needs_mask:
            # Only the last (ragged) tile pays for the lane mask.  Its
            # out-of-bounds lanes hold garbage, so mask BOTH sum and max.
            @pl.when(j < nj - 1)
            def _full():
                _accumulate_full()

            @pl.when(j == nj - 1)
            def _ragged():
                lane = jax.lax.broadcasted_iota(jnp.int32, x.shape, 1) + j * hw_tile
                valid = lane < hw_valid
                xf = x.astype(jnp.float32)
                sum_sc[...] += jnp.sum(jnp.where(valid, xf, 0.0),
                                       axis=-1, keepdims=True)
                max_sc[...] = jnp.maximum(
                    max_sc[...],
                    jnp.max(jnp.where(valid, xf, -jnp.inf), axis=-1, keepdims=True))
        else:
            _accumulate_full()

        @pl.when(j == nj - 1)
        def _finish():
            scale = _mlp_scale(sum_sc[...] * inv_hw, max_sc[...], w1_ref, w2_ref)
            scale_ref[...] = scale[None]                               # (1, C, 1) f32
    return kernel


# --------------------------------------------------------------------------
# Path 2b: apply  out = x * scale  (lane-dense HW tiles, fully parallel grid)
# --------------------------------------------------------------------------
def _apply_kernel(x_ref, scale_ref, o_ref):
    x = x_ref[0]                                                       # (C, T)
    s = scale_ref[0].astype(x.dtype)                                   # (C, 1)
    o_ref[...] = (x * s)[None].astype(o_ref.dtype)


# --------------------------------------------------------------------------
# Wrapper
# --------------------------------------------------------------------------
def channel_attention(x_nchw, w1, w2, *, hw_tile=None, force_split=False,
                      donate_x=False):
    """x_nchw: (B, C, H, W); w1: (C//r, C) [Conv2d(C,Cr,1)]; w2: (C, C//r)."""
    B, C, H, W = x_nchw.shape
    Cr = w1.shape[0]
    HW = H * W
    itemsize = jnp.dtype(x_nchw.dtype).itemsize
    x3 = x_nchw.reshape(B, C, HW)

    vmem_cap = _vmem_capacity_bytes()
    num_tc = _num_tensorcores_heuristic(vmem_cap)

    tile_bytes = C * HW * itemsize
    weight_bytes = (w1.size + w2.size) * jnp.dtype(w1.dtype).itemsize
    x_bytes = B * tile_bytes
    mlp_flops = 8 * C * Cr            # per batch: two (CrxC)@(Cx2) style dots

    # Fused footprint: double-buffered x block in + out + double-buffered weights.
    fused_footprint = 4 * tile_bytes + 2 * weight_bytes
    fused_budget = int(vmem_cap * 0.80)     # ~51 MiB on v7x, ~102 MiB on v5e/v6e

    # On multi-TC chips (v7x) a grid=(B,) fused launch idles the second core
    # when B is too small; prefer the split path (apply grid is parallel over
    # both B and HW) once the per-batch tile is non-trivial.
    prefer_split = num_tc > 1 and B < num_tc and tile_bytes >= (2 << 20)

    aliases = {0: 0} if donate_x else {}

    # ---- fused single-pass path (x streamed exactly once in / once out) ----
    if not force_split and not prefer_split and fused_footprint <= fused_budget:
        vmem_limit = int(min(max(fused_footprint + (4 << 20), 16 << 20),
                             vmem_cap - (8 << 20)))
        cost = pl.CostEstimate(
            flops=int(B * (mlp_flops + 3 * C * HW)),
            transcendentals=int(B * C),
            bytes_accessed=int(2 * x_bytes + weight_bytes))
        out3 = pl.pallas_call(
            _make_fused_kernel(1.0 / HW),
            out_shape=jax.ShapeDtypeStruct((B, C, HW), x_nchw.dtype),
            grid=(B,),
            in_specs=[
                pl.BlockSpec((1, C, HW), lambda b: (b, 0, 0)),
                pl.BlockSpec((Cr, C), lambda b: (0, 0)),
                pl.BlockSpec((C, Cr), lambda b: (0, 0)),
            ],
            out_specs=pl.BlockSpec((1, C, HW), lambda b: (b, 0, 0)),
            compiler_params=pltpu.CompilerParams(
                dimension_semantics=("parallel",),
                vmem_limit_bytes=vmem_limit),
            cost_estimate=cost,
            input_output_aliases=aliases,
        )(x3, w1, w2)
        return out3.reshape(B, C, H, W)

    # ---- split two-pass path (large feature maps / small VMEM / small B) ----
    if hw_tile is None:
        # Lane-dense HW tile, sized by bytes from the VMEM capacity
        # (~4 MiB blocks on v7x, ~8 MiB on 128 MiB chips). No hard lane cap.
        target_block_bytes = max(2 << 20, min(8 << 20, vmem_cap // 16))
        max_t = max(128, (target_block_bytes // max(C * itemsize, 1)) // 128 * 128)
        hw_tile = min(_round_up(HW, 128), max_t)
    hw_tile = max(128, _round_up(hw_tile, 128))
    n_hw = pl.cdiv(HW, hw_tile)
    needs_mask = (HW % hw_tile) != 0
    block_bytes = C * hw_tile * itemsize

    # Pass 1: pooled statistics + MLP -> per-batch channel scale.
    pool_vmem = int(min(max(2 * block_bytes + 2 * weight_bytes + (4 << 20), 16 << 20),
                        vmem_cap - (8 << 20)))
    pool_cost = pl.CostEstimate(
        flops=int(B * (2 * C * HW + mlp_flops)),
        transcendentals=int(B * C),
        bytes_accessed=int(x_bytes + weight_bytes + B * C * 4))
    scale = pl.pallas_call(
        _make_pool_mlp_kernel(HW, hw_tile, needs_mask),
        out_shape=jax.ShapeDtypeStruct((B, C, 1), jnp.float32),
        grid=(B, n_hw),
        in_specs=[
            pl.BlockSpec((1, C, hw_tile), lambda b, j: (b, 0, j)),
            pl.BlockSpec((Cr, C), lambda b, j: (0, 0)),
            pl.BlockSpec((C, Cr), lambda b, j: (0, 0)),
        ],
        out_specs=pl.BlockSpec((1, C, 1), lambda b, j: (b, 0, 0)),
        scratch_shapes=[pltpu.VMEM((C, 1), jnp.float32),
                        pltpu.VMEM((C, 1), jnp.float32)],
        compiler_params=pltpu.CompilerParams(
            dimension_semantics=("parallel", "arbitrary"),
            vmem_limit_bytes=pool_vmem),
        cost_estimate=pool_cost,
    )(x3, w1, w2)

    # Pass 2: gated residual apply; both grid axes parallel (dual-TC on v7x).
    # Ragged last tile: OOB lanes read garbage but their writes are dropped.
    apply_vmem = int(min(max(4 * block_bytes + (4 << 20), 16 << 20),
                         vmem_cap - (8 << 20)))
    apply_cost = pl.CostEstimate(
        flops=int(2 * B * C * HW),
        transcendentals=0,
        bytes_accessed=int(2 * x_bytes + B * C * 4))
    out3 = pl.pallas_call(
        _apply_kernel,
        out_shape=jax.ShapeDtypeStruct((B, C, HW), x_nchw.dtype),
        grid=(B, n_hw),
        in_specs=[
            pl.BlockSpec((1, C, hw_tile), lambda b, j: (b, 0, j)),
            pl.BlockSpec((1, C, 1), lambda b, j: (b, 0, 0)),
        ],
        out_specs=pl.BlockSpec((1, C, hw_tile), lambda b, j: (b, 0, j)),
        compiler_params=pltpu.CompilerParams(
            dimension_semantics=("parallel", "parallel"),
            vmem_limit_bytes=apply_vmem),
        cost_estimate=apply_cost,
        input_output_aliases=aliases,
    )(x3, scale)

    return out3.reshape(B, C, H, W)


# --------------------------------------------------------------------------
# Pure-JAX reference (matches the PyTorch forward)
# --------------------------------------------------------------------------
def channel_attention_ref(x, w1, w2):
    xf = x.astype(jnp.float32)
    avg_p = jnp.mean(xf, axis=(2, 3))          # (B, C)
    max_p = jnp.max(xf, axis=(2, 3))           # (B, C)

    def mlp(v):
        h = jnp.maximum(v @ w1.astype(jnp.float32).T, 0.0)
        return h @ w2.astype(jnp.float32).T

    att = jax.nn.sigmoid(mlp(avg_p) + mlp(max_p))          # (B, C)
    out = xf + xf * att[:, :, None, None]
    return out.astype(x.dtype)


if __name__ == "__main__":
    B, C, H, W = 2, 4, 16, 16
    reduction_ratio = 2
    Cr = C // reduction_ratio

    key = jax.random.PRNGKey(0)
    kx, k1, k2 = jax.random.split(key, 3)

    x = jax.random.normal(kx, (B, C, H, W), dtype=jnp.float32)
    # Deterministic synthetic weights for the two bias-free 1x1 convs.
    w1 = jax.random.normal(k1, (Cr, C), dtype=jnp.float32) * 0.5   # Conv2d(C, Cr, 1)
    w2 = jax.random.normal(k2, (C, Cr), dtype=jnp.float32) * 0.5   # Conv2d(Cr, C, 1)

    ref = channel_attention_ref(x, w1, w2)

    # Fused single-pass path.
    out_fused = jax.block_until_ready(channel_attention(x, w1, w2))
    assert out_fused.shape == (B, C, H, W)
    assert jnp.allclose(out_fused, ref, atol=1e-5, rtol=1e-5), "fused path mismatch"

    # Two-pass split path, evenly divided HW tiles (HW=256, tile=128 -> 2 tiles).
    out_split = jax.block_until_ready(
        channel_attention(x, w1, w2, force_split=True, hw_tile=128))
    assert out_split.shape == (B, C, H, W)
    assert jnp.allclose(out_split, ref, atol=1e-5, rtol=1e-5), "split path mismatch"

    # Split path with a ragged last tile (HW=144, tile=128 -> 128 + 16 valid),
    # exercising the in-kernel sum+max masking (no wrapper pad/slice copies).
    H2, W2 = 12, 12
    x2 = jax.random.normal(kx, (B, C, H2, W2), dtype=jnp.float32)
    ref2 = channel_attention_ref(x2, w1, w2)
    out_ragged = jax.block_until_ready(
        channel_attention(x2, w1, w2, force_split=True, hw_tile=128))
    assert out_ragged.shape == (B, C, H2, W2)
    assert jnp.allclose(out_ragged, ref2, atol=1e-5, rtol=1e-5), "ragged split mismatch"

    print("KERNEL_OK")
</pallas_src>

<mosaic_0001>
module attributes {stable_mosaic.version = 11 : i64} {
  func.func @kernel(%arg0: i32, %arg1: memref<1x4x256xf32, #tpu.memory_space<vmem>>, %arg2: memref<2x4xf32, #tpu.memory_space<vmem>>, %arg3: memref<4x2xf32, #tpu.memory_space<vmem>>, %arg4: memref<1x4x256xf32, #tpu.memory_space<vmem>>) attributes {dimension_semantics = [#tpu.dimension_semantics<parallel>], iteration_bounds = array<i64: 2>, scalar_prefetch = 0 : i64, scratch_operands = 0 : i64, tpu.core_type = #tpu.core_type<tc>, window_params = [{transform_indices = @transform_0, window_bounds = array<i64: 1, 4, 256>}, {pipeline_mode = #tpu.pipeline_mode<synchronous>, transform_indices = @transform_1, window_bounds = array<i64: 2, 4>}, {pipeline_mode = #tpu.pipeline_mode<synchronous>, transform_indices = @transform_2, window_bounds = array<i64: 4, 2>}, {transform_indices = @transform_3, window_bounds = array<i64: 1, 4, 256>}]} {
    %c0 = arith.constant 0 : index
    %c0_0 = arith.constant 0 : index
    %c0_1 = arith.constant 0 : index
    %0 = vector.load %arg1[%c0, %c0_0, %c0_1] : memref<1x4x256xf32, #tpu.memory_space<vmem>>, vector<1x4x256xf32>
    %1 = vector.shape_cast %0 : vector<1x4x256xf32> to vector<4x256xf32>
    %cst = arith.constant dense<0.000000e+00> : vector<4xf32>
    %2 = vector.multi_reduction <add>, %1, %cst [1] : vector<4x256xf32> to vector<4xf32>
    %3 = vector.shape_cast %2 : vector<4xf32> to vector<4x1xf32>
    %cst_2 = arith.constant dense<0xFF800000> : vector<4xf32>
    %4 = vector.multi_reduction <maximumf>, %1, %cst_2 [1] : vector<4x256xf32> to vector<4xf32>
    %5 = vector.shape_cast %4 : vector<4xf32> to vector<4x1xf32>
    %cst_3 = arith.constant 3.906250e-03 : f32
    %6 = vector.broadcast %cst_3 : f32 to vector<4x1xf32>
    %7 = arith.mulf %3, %6 : vector<4x1xf32>
    %8 = tpu.iota {dimensions = array<i32: 1>} : vector<4x2xi32>
    %c0_i32 = arith.constant 0 : i32
    %9 = vector.broadcast %c0_i32 : i32 to vector<4x2xi32>
    %10 = arith.cmpi eq, %8, %9 : vector<4x2xi32>
    %11 = vector.shape_cast %7 : vector<4x1xf32> to vector<4x1xf32>
    %12 = vector.broadcast %11 : vector<4x1xf32> to vector<4x2xf32>
    %13 = vector.shape_cast %5 : vector<4x1xf32> to vector<4x1xf32>
    %14 = vector.broadcast %13 : vector<4x1xf32> to vector<4x2xf32>
    %15 = arith.select %10, %12, %14 : vector<4x2xi1>, vector<4x2xf32>
    %c0_4 = arith.constant 0 : index
    %c0_5 = arith.constant 0 : index
    %16 = vector.load %arg2[%c0_4, %c0_5] : memref<2x4xf32, #tpu.memory_space<vmem>>, vector<2x4xf32>
    %c0_6 = arith.constant 0 : index
    %c0_7 = arith.constant 0 : index
    %17 = vector.load %arg3[%c0_6, %c0_7] : memref<4x2xf32, #tpu.memory_space<vmem>>, vector<4x2xf32>
    %cst_8 = arith.constant dense<0.000000e+00> : vector<2x2xf32>
    %18 = tpu.matmul %16, %15, %cst_8 {dimension_numbers = #tpu.dot_dimension_numbers<[1], [0], [0], [1], [0, 0, 1, 1], [], []>} : vector<2x4xf32>, vector<4x2xf32>, vector<2x2xf32> -> vector<2x2xf32>
    %cst_9 = arith.constant 0.000000e+00 : f32
    %19 = vector.broadcast %cst_9 : f32 to vector<2x2xf32>
    %20 = arith.maximumf %18, %19 : vector<2x2xf32>
    %cst_10 = arith.constant dense<0.000000e+00> : vector<4x2xf32>
    %21 = tpu.matmul %17, %20, %cst_10 {dimension_numbers = #tpu.dot_dimension_numbers<[1], [0], [0], [1], [0, 0, 1, 1], [], []>} : vector<4x2xf32>, vector<2x2xf32>, vector<4x2xf32> -> vector<4x2xf32>
    %22 = vector.extract_strided_slice %21 {offsets = [0, 0], sizes = [4, 1], strides = [1, 1]} : vector<4x2xf32> to vector<4x1xf32>
    %23 = vector.extract_strided_slice %21 {offsets = [0, 1], sizes = [4, 1], strides = [1, 1]} : vector<4x2xf32> to vector<4x1xf32>
    %24 = arith.addf %22, %23 : vector<4x1xf32>
    %25 = arith.negf %24 : vector<4x1xf32>
    %26 = math.exp %25 : vector<4x1xf32>
    %cst_11 = arith.constant 1.000000e+00 : f32
    %27 = vector.broadcast %cst_11 : f32 to vector<4x1xf32>
    %28 = arith.addf %27, %26 : vector<4x1xf32>
    %29 = arith.divf %27, %28 : vector<4x1xf32>
    %cst_12 = arith.constant 1.000000e+00 : f32
    %30 = vector.broadcast %cst_12 : f32 to vector<4x1xf32>
    %31 = arith.addf %30, %29 : vector<4x1xf32>
    %32 = vector.broadcast %31 : vector<4x1xf32> to vector<4x256xf32>
    %33 = arith.mulf %1, %32 : vector<4x256xf32>
    %34 = vector.shape_cast %33 : vector<4x256xf32> to vector<1x4x256xf32>
    %c0_13 = arith.constant 0 : index
    %c0_14 = arith.constant 0 : index
    %c0_15 = arith.constant 0 : index
    %35 = vector.load %arg4[%c0_13, %c0_14, %c0_15] : memref<1x4x256xf32, #tpu.memory_space<vmem>>, vector<1x4x256xf32>
    tpu.vector_store %arg4[%c0_13, %c0_14, %c0_15], %34 {strides = array<i32>} : memref<1x4x256xf32, #tpu.memory_space<vmem>>, vector<1x4x256xf32>,
    return
  }
  func.func @transform_0(%arg0: i32) -> (i32, i32, i32) {
    %c0_i32 = arith.constant 0 : i32
    %c0_i32_0 = arith.constant 0 : i32
    %c0_i32_1 = arith.constant 0 : i32
    return %arg0, %c0_i32, %c0_i32_0 : i32, i32, i32
  }
  func.func @transform_1(%arg0: i32) -> (i32, i32) {
    %c0_i32 = arith.constant 0 : i32
    %c0_i32_0 = arith.constant 0 : i32
    %c0_i32_1 = arith.constant 0 : i32
    return %c0_i32, %c0_i32_0 : i32, i32
  }
  func.func @transform_2(%arg0: i32) -> (i32, i32) {
    %c0_i32 = arith.constant 0 : i32
    %c0_i32_0 = arith.constant 0 : i32
    %c0_i32_1 = arith.constant 0 : i32
    return %c0_i32, %c0_i32_0 : i32, i32
  }
  func.func @transform_3(%arg0: i32) -> (i32, i32, i32) {
    %c0_i32 = arith.constant 0 : i32
    %c0_i32_0 = arith.constant 0 : i32
    %c0_i32_1 = arith.constant 0 : i32
    return %arg0, %c0_i32, %c0_i32_0 : i32, i32, i32
  }
}

</mosaic_0001>

<llo_original>
// kernel: tpu_custom_call.1
$region0: #{tpu_custom_call.1}
  #allocation0 [shape = 'u32[]', space=smem, size = 0x4, offset = 0x4, fixed_abs, tag = 'smem constant byte address 0x4 - core index']
  #allocation1 [shape = 'u32[144,128]{1,0:T(1,128)}', space=vmem, size = 0x12000, scoped, tag = 'internal scratch']
  %s0 = inlined_call_operand.hbm [shape: f32[2,4,256], index: 0, kind: input, shape index: {}]
  %s1 = inlined_call_operand.vmem [shape: f32[2,4], index: 1, kind: input, shape index: {}]
  %s2 = inlined_call_operand.vmem [shape: f32[4,2], index: 2, kind: input, shape index: {}]
  %s3 = inlined_call_operand.hbm [shape: f32[2,4,256], index: 3, kind: output, shape index: {}]
  %s4 = sld [smem:[#allocation0]]
  $region49: #{tpu_custom_call.1} parent=0
    _
  %s6 = ssub.s32 1, %s4
  %s7 = scalar_select 0, %s6, %s4
  $region1: #{tpu_custom_call.1} parent=0
    #allocation2 [shape = 'u8[8192]{0}', space=vmem, size = 0x2000, scoped, tag = 'input window, operand 0']
    #allocation3 [shape = 's32[2]{0}', space=sflag, size = 0x8, scoped, tag = 'scoped memory for tpu_custom_call.1']
    #allocation4 [shape = 's32[2]{0}', space=sflag, size = 0x8, scoped, tag = 'scoped memory for tpu_custom_call.1']
    #allocation5 [shape = 'u8[8192]{0}', space=vmem, size = 0x2000, scoped, tag = 'output window, operand 0']
    %8 = vsyncpa [#allocation3], 0
    %s9 = scalar_lea.sflag [#allocation3], 1
    %10 = vsyncpa %s9, 0
    %11 = vsyncpa [#allocation4], 0
    %s12 = scalar_lea.sflag [#allocation4], 1
    %13 = vsyncpa %s12, 0
    loop: start=0, step=1, limit=4
    $region2: #{tpu_custom_call.1} parent=1 // loop_pre_header
      _
    $region3: #{tpu_custom_call.1} parent=1 // loop_header
      %s15 = sphi 0, %s19
      %p16 = scmp.ge.s32.totalorder %s15, 4
      %s25 = sphi 0, %s27
      %s28 = sphi 0, %s25
      %s29 = sphi 0, %s28
      %s45 = sphi 0, %s29
      %s49 = sphi 0, %s49
      %s51 = sphi 0, %s49
      %s52 = sphi 0, %s51
      %s66 = sphi 0, %s52
      %s70 = sphi 0, %s70
      %s72 = sphi 0, %s70
      %s73 = sphi 0, %s72
      %s87 = sphi 0, %s73
      %s93 = sphi 0, %s95
      %s96 = sphi 0, %s93
      %s97 = sphi 0, %s96
      %s113 = sphi 0, %s97
    $region4: #{tpu_custom_call.1} parent=1 // loop_header_branch
      %18 = sbr.rel (%p16) target = $region8
    $region5: #{tpu_custom_call.1} parent=1 // loop_body
      %s20 = ssub.s32 %s15, 1
      %s21 = ssub.s32 %s15, 2
      %s22 = sadd.s32 %s15, 1
      %s23 = ssub.s32 %s15, %s22
      %p24 = scmp.eq.s32.totalorder %s23, 0
      %s26 = sadd.s32 %s25, 1
      %s27 = scalar_select %p24, %s25, %s26
      %p30 = pneg %p24
      %p31 = scmp.eq.s32.totalorder %s15, 1
      %p32 = por %p30, %p31
      %p33 = scmp.ne.s32.totalorder %s25, %s28
      %p34 = scmp.eq.s32.totalorder %s15, 0
      %p35 = por %p33, %p34
      %p36 = scmp.ne.s32.totalorder %s25, %s28
      %p37 = scmp.eq.s32.totalorder %s20, 1
      %p38 = por %p36, %p37
      %p39 = scmp.ne.s32.totalorder %s28, %s29
      %p40 = scmp.eq.s32.totalorder %s20, 0
      %p41 = por %p39, %p40
      %p42 = scmp.ne.s32.totalorder %s28, %s29
      %p43 = scmp.eq.s32.totalorder %s21, 1
      %p44 = por %p42, %p43
      %p46 = scmp.ne.s32.totalorder %s29, %s45
      %p47 = scmp.eq.s32.totalorder %s21, 0
      %p48 = por %p46, %p47
      %s50 = sadd.s32 %s49, 1
      %p53 = scmp.eq.s32.totalorder %s15, 1
      %p54 = scmp.ne.s32.totalorder %s49, %s51
      %p55 = scmp.eq.s32.totalorder %s15, 0
      %p56 = por %p54, %p55
      %p57 = scmp.ne.s32.totalorder %s49, %s51
      %p58 = scmp.eq.s32.totalorder %s20, 1
      %p59 = por %p57, %p58
      %p60 = scmp.ne.s32.totalorder %s51, %s52
      %p61 = scmp.eq.s32.totalorder %s20, 0
      %p62 = por %p60, %p61
      %p63 = scmp.ne.s32.totalorder %s51, %s52
      %p64 = scmp.eq.s32.totalorder %s21, 1
      %p65 = por %p63, %p64
      %p67 = scmp.ne.s32.totalorder %s52, %s66
      %p68 = scmp.eq.s32.totalorder %s21, 0
      %p69 = por %p67, %p68
      %s71 = sadd.s32 %s70, 1
      %p74 = scmp.eq.s32.totalorder %s15, 1
      %p75 = scmp.ne.s32.totalorder %s70, %s72
      %p76 = scmp.eq.s32.totalorder %s15, 0
      %p77 = por %p75, %p76
      %p78 = scmp.ne.s32.totalorder %s70, %s72
      %p79 = scmp.eq.s32.totalorder %s20, 1
      %p80 = por %p78, %p79
      %p81 = scmp.ne.s32.totalorder %s72, %s73
      %p82 = scmp.eq.s32.totalorder %s20, 0
      %p83 = por %p81, %p82
      %p84 = scmp.ne.s32.totalorder %s72, %s73
      %p85 = scmp.eq.s32.totalorder %s21, 1
      %p86 = por %p84, %p85
      %p88 = scmp.ne.s32.totalorder %s73, %s87
      %p89 = scmp.eq.s32.totalorder %s21, 0
      %p90 = por %p88, %p89
      %s91 = ssub.s32 %s15, %s22
      %p92 = scmp.eq.s32.totalorder %s91, 0
      %s94 = sadd.s32 %s93, 1
      %s95 = scalar_select %p92, %s93, %s94
      %p98 = pneg %p92
      %p99 = scmp.eq.s32.totalorder %s15, 1
      %p100 = por %p98, %p99
      %p101 = scmp.ne.s32.totalorder %s93, %s96
      %p102 = scmp.eq.s32.totalorder %s15, 0
      %p103 = por %p101, %p102
      %p104 = scmp.ne.s32.totalorder %s93, %s96
      %p105 = scmp.eq.s32.totalorder %s20, 1
      %p106 = por %p104, %p105
      %p107 = scmp.ne.s32.totalorder %s96, %s97
      %p108 = scmp.eq.s32.totalorder %s20, 0
      %p109 = por %p107, %p108
      %p110 = scmp.ne.s32.totalorder %s96, %s97
      %p111 = scmp.eq.s32.totalorder %s21, 1
      %p112 = por %p110, %p111
      %p114 = scmp.ne.s32.totalorder %s97, %s113
      %p115 = scmp.eq.s32.totalorder %s21, 0
      %p116 = por %p114, %p115
      %p117 = scmp.le.s32.totalorder 1, %s15
      %p118 = scmp.lt.s32.totalorder %s15, 3
      %p119 = pnand %p117, %p118
      %p120 = pneg %p119
      // Predicated region
      $region9: #{tpu_custom_call.1} parent=5 // pred_check
        _
      $region10: #{tpu_custom_call.1} parent=5 // pred_check_branch
        %122 = sbr.rel (%p119) target = $region12
      $region11: #{tpu_custom_call.1} parent=5 // pred_region
        %s123 = ssub.s32 %s15, 1
        // Predicated region
        $region13: #{tpu_custom_call.1} parent=11 // pred_check
          %p124 = pneg %p62
        $region14: #{tpu_custom_call.1} parent=11 // pred_check_branch
          %126 = sbr.rel (%p124) target = $region16
        $region15: #{tpu_custom_call.1} parent=11 // pred_region
          _
        $region16: #{tpu_custom_call.1} parent=11 // pred_fallthru
          _
        // Predicated region
        $region17: #{tpu_custom_call.1} parent=11 // pred_check
          %p127 = pneg %p83
        $region18: #{tpu_custom_call.1} parent=11 // pred_check_branch
          %129 = sbr.rel (%p127) target = $region20
        $region19: #{tpu_custom_call.1} parent=11 // pred_region
          _
        $region20: #{tpu_custom_call.1} parent=11 // pred_fallthru
          _
      $region12: #{tpu_custom_call.1} parent=5 // pred_fallthru
        _
      %p130 = scmp.lt.s32.totalorder %s15, 2
      // Predicated region
      $region21: #{tpu_custom_call.1} parent=5 // pred_check
        %p131 = pneg %p130
      $region22: #{tpu_custom_call.1} parent=5 // pred_check_branch
        %133 = sbr.rel (%p131) target = $region24
      $region23: #{tpu_custom_call.1} parent=5 // pred_region
        // Predicated region
        $region25: #{tpu_custom_call.1} parent=23 // pred_check
          %p134 = pneg %p35
        $region26: #{tpu_custom_call.1} parent=23 // pred_check_branch
          %136 = sbr.rel (%p134) target = $region28
        $region27: #{tpu_custom_call.1} parent=23 // pred_region
          %s137 = sand.u32 %s25, 1
          %s138 = scalar_lea.sflag [#allocation3], %s137
          %s139 = sand.u32 %s25, 1
          %s140 = smul.addr %s139, 8
          %s141 = scalar_lea.vmem [#allocation2], %s140
          %s143 = ssub.s32 128, 128
          %144 = vsyncadd %s138, %s143
          %s145 = smul.addr %s15, 2
          %s146 = smul.addr %s145, 64
          %s147 = scalar_lea.hbm %s0, %s146
          %s149 = sshll.u32 %s141, 4
          %s150 = int_to_ptr.vmem [resolvable:$true] %s149
          %152 = dma.hbm_to_vmem [thread:$0]  %s147, 128, %s150, %s138
        $region28: #{tpu_custom_call.1} parent=23 // pred_fallthru
          _
      $region24: #{tpu_custom_call.1} parent=5 // pred_fallthru
        _
      %p153 = scmp.le.s32.totalorder 1, %s15
      %p154 = scmp.lt.s32.totalorder %s15, 3
      %p155 = pnand %p153, %p154
      %p156 = pneg %p155
      // Predicated region
      $region29: #{tpu_custom_call.1} parent=5 // pred_check
        _
      $region30: #{tpu_custom_call.1} parent=5 // pred_check_branch
        %158 = sbr.rel (%p155) target = $region32
      $region31: #{tpu_custom_call.1} parent=5 // pred_region
        %s159 = ssub.s32 %s15, 1
        %s160 = sand.u32 %s28, 1
        %s161 = scalar_lea.sflag [#allocation3], %s160
        %s162 = sand.u32 %s28, 1
        %s163 = smul.addr %s162, 8
        %s164 = scalar_lea.vmem [#allocation2], %s163
        // Predicated region
        $region33: #{tpu_custom_call.1} parent=31 // pred_check
          %p165 = pneg %p41
        $region34: #{tpu_custom_call.1} parent=31 // pred_check_branch
          %167 = sbr.rel (%p165) target = $region36
        $region35: #{tpu_custom_call.1} parent=31 // pred_region
          %168 = dma.done %s161, 128
        $region36: #{tpu_custom_call.1} parent=31 // pred_fallthru
          _
        %s169 = sand.u32 %s28, 1
        %s170 = scalar_lea.sflag [#allocation3], %s169
        %s171 = sand.u32 %s28, 1
        %s172 = smul.addr %s171, 8
        %s173 = scalar_lea.vmem [#allocation2], %s172
        %p174 = pneg %p41
        %p175 = pneg %p38
        %p176 = pneg %p62
        %p177 = pneg %p59
        %p178 = pneg %p83
        %p179 = pneg %p80
        %p180 = pneg %p109
        %p181 = pneg %p106
        %s182 = sand.u32 %s96, 1
        %s183 = scalar_lea.sflag [#allocation4], %s182
        %s184 = sand.u32 %s96, 1
        %s185 = smul.addr %s184, 8
        %s186 = scalar_lea.vmem [#allocation5], %s185
        %v187 = vld [vmem:[%s164] sm:$0xff]
        %v189 = vcombine.high %v187, %v187
        %vm191 = vcmask 1043456
        %v192 = vsel %vm191, %v187, 0.0
        %v193 = vsel %vm191, %v189, 0.0
        %v194 = vadd.f32 %v192, %v193
        %195 = vadd.xlane.f32.xlu0 %v194
        %v196 = vpop.xlane.xlu0 %195
        %v197 = vsel %vm191, %v187, -inf
        %v198 = vsel %vm191, %v189, -inf
        %v199 = vmax.f32 %v197, %v198
        %200 = vmax.xlane.f32.xlu0 %v199
        %v201 = vpop.xlane.xlu0 %200
        %v202 = vmul.f32 %v196, 0.00390625
        %v203 = vlaneseq
        %v204 = vand.u32 %v203, 127
        %vm205 = vcmp.eq.s32.totalorder %v204, 0
        %v206 = vsel %vm205, %v202, %v201
        %v207 = vld [vmem:[%s1] sm:$0x3]
        %v208 = vld [vmem:[%s2] sm:$0xf]
        %vm209 = vcmask 31744
        %v211 = vsel %vm209, %v207, 0
        %v214 = vsel %vm191, %v206, 0
        %216 = vmatprep.subr.mxu0 0.0
        %217 = vmatpush1.msra.mxu0 0.0
        %218 = vmatprep.subr.mxu0 0.0
        %219 = vmatpush1.msra.mxu0 0.0
        %220 = vmatprep.subr.mxu0 0.0
        %221 = vmatpush1.msra.mxu0 0.0
        %222 = vmatprep.subr.mxu0 0.0
        %223 = vmatpush1.msra.mxu0 0.0
        %224 = vmatprep.subr.mxu0 0.0
        %225 = vmatpush1.msra.mxu0 0.0
        %226 = vmatprep.subr.mxu0 0.0
        %227 = vmatpush1.msra.mxu0 0.0
        %228 = vmatprep.subr.mxu0 0.0
        %229 = vmatpush1.msra.mxu0 0.0
        %230 = vmatprep.subr.mxu0 0.0
        %231 = vmatpush1.msra.mxu0 0.0
        %232 = vmatprep.subr.mxu0 0.0
        %233 = vmatpush1.msra.mxu0 0.0
        %234 = vmatprep.subr.mxu0 0.0
        %235 = vmatpush1.msra.mxu0 0.0
        %236 = vmatprep.subr.mxu0 0.0
        %237 = vmatpush1.msra.mxu0 0.0
        %238 = vmatprep.subr.mxu0 0.0
        %239 = vmatpush1.msra.mxu0 0.0
        %240 = vmatprep.subr.mxu0 0.0
        %241 = vmatpush1.msra.mxu0 0.0
        %242 = vmatprep.subr.mxu0 0.0
        %243 = vmatpush1.msra.mxu0 0.0
        %244 = vmatprep.subr.mxu0 0.0
        %245 = vmatpush1.msra.mxu0 0.0
        %246 = vmatprep.subr.mxu0 0.0
        %247 = vmatpush1.msra.mxu0 %v214
        %248 = vmatprep.subr.mxu0 0.0
        %249 = vmatpush2.msra.mxu0 0.0
        %250 = vmatprep.subr.mxu0 0.0
        %251 = vmatpush2.msra.mxu0 0.0
        %252 = vmatprep.subr.mxu0 0.0
        %253 = vmatpush2.msra.mxu0 0.0
        %254 = vmatprep.subr.mxu0 0.0
        %255 = vmatpush2.msra.mxu0 0.0
        %256 = vmatprep.subr.mxu0 0.0
        %257 = vmatpush2.msra.mxu0 0.0
        %258 = vmatprep.subr.mxu0 0.0
        %259 = vmatpush2.msra.mxu0 0.0
        %260 = vmatprep.subr.mxu0 0.0
        %261 = vmatpush2.msra.mxu0 0.0
        %262 = vmatprep.subr.mxu0 0.0
        %263 = vmatpush2.msra.mxu0 0.0
        %264 = vmatprep.subr.mxu0 0.0
        %265 = vmatpush2.msra.mxu0 0.0
        %266 = vmatprep.subr.mxu0 0.0
        %267 = vmatpush2.msra.mxu0 0.0
        %268 = vmatprep.subr.mxu0 0.0
        %269 = vmatpush2.msra.mxu0 0.0
        %270 = vmatprep.subr.mxu0 0.0
        %271 = vmatpush2.msra.mxu0 0.0
        %272 = vmatprep.subr.mxu0 0.0
        %273 = vmatpush2.msra.mxu0 0.0
        %274 = vmatprep.subr.mxu0 0.0
        %275 = vmatpush2.msra.mxu0 0.0
        %276 = vmatprep.subr.mxu0 0.0
        %277 = vmatpush2.msra.mxu0 0.0
        %278 = vmatprep.subr.mxu0 0.0
        %279 = vmatpush2.msra.mxu0 0.0
        %280 = vmatprep.mubr.f32.mxu0 0.0
        %281 = vmatmul.mubr.f32.gmra.mxu0 %v211
        %v282 = vpop.f32.mrf.mxu0
        %v283 = vadd.f32 0.0, %v282
        %v284 = vpop.f32.mrf.mxu0
        %285 = vdwg.mxu0
        %v286 = vmax.f32 %v283, 0.0
        %vm287 = vcmask 15360
        %v289 = vsel %vm287, %v208, 0
        %vm291 = vcmask 1041408
        %v293 = vsel %vm291, %v286, 0
        %295 = vmatprep.subr.mxu0 0.0
        %296 = vmatpush1.msra.mxu0 0.0
        %297 = vmatprep.subr.mxu0 0.0
        %298 = vmatpush1.msra.mxu0 0.0
        %299 = vmatprep.subr.mxu0 0.0
        %300 = vmatpush1.msra.mxu0 0.0
        %301 = vmatprep.subr.mxu0 0.0
        %302 = vmatpush1.msra.mxu0 0.0
        %303 = vmatprep.subr.mxu0 0.0
        %304 = vmatpush1.msra.mxu0 0.0
        %305 = vmatprep.subr.mxu0 0.0
        %306 = vmatpush1.msra.mxu0 0.0
        %307 = vmatprep.subr.mxu0 0.0
        %308 = vmatpush1.msra.mxu0 0.0
        %309 = vmatprep.subr.mxu0 0.0
        %310 = vmatpush1.msra.mxu0 0.0
        %311 = vmatprep.subr.mxu0 0.0
        %312 = vmatpush1.msra.mxu0 0.0
        %313 = vmatprep.subr.mxu0 0.0
        %314 = vmatpush1.msra.mxu0 0.0
        %315 = vmatprep.subr.mxu0 0.0
        %316 = vmatpush1.msra.mxu0 0.0
        %317 = vmatprep.subr.mxu0 0.0
        %318 = vmatpush1.msra.mxu0 0.0
        %319 = vmatprep.subr.mxu0 0.0
        %320 = vmatpush1.msra.mxu0 0.0
        %321 = vmatprep.subr.mxu0 0.0
        %322 = vmatpush1.msra.mxu0 0.0
        %323 = vmatprep.subr.mxu0 0.0
        %324 = vmatpush1.msra.mxu0 0.0
        %325 = vmatprep.subr.mxu0 0.0
        %326 = vmatpush1.msra.mxu0 %v293
        %327 = vmatprep.subr.mxu0 0.0
        %328 = vmatpush2.msra.mxu0 0.0
        %329 = vmatprep.subr.mxu0 0.0
        %330 = vmatpush2.msra.mxu0 0.0
        %331 = vmatprep.subr.mxu0 0.0
        %332 = vmatpush2.msra.mxu0 0.0
        %333 = vmatprep.subr.mxu0 0.0
        %334 = vmatpush2.msra.mxu0 0.0
        %335 = vmatprep.subr.mxu0 0.0
        %336 = vmatpush2.msra.mxu0 0.0
        %337 = vmatprep.subr.mxu0 0.0
        %338 = vmatpush2.msra.mxu0 0.0
        %339 = vmatprep.subr.mxu0 0.0
        %340 = vmatpush2.msra.mxu0 0.0
        %341 = vmatprep.subr.mxu0 0.0
        %342 = vmatpush2.msra.mxu0 0.0
        %343 = vmatprep.subr.mxu0 0.0
        %344 = vmatpush2.msra.mxu0 0.0
        %345 = vmatprep.subr.mxu0 0.0
        %346 = vmatpush2.msra.mxu0 0.0
        %347 = vmatprep.subr.mxu0 0.0
        %348 = vmatpush2.msra.mxu0 0.0
        %349 = vmatprep.subr.mxu0 0.0
        %350 = vmatpush2.msra.mxu0 0.0
        %351 = vmatprep.subr.mxu0 0.0
        %352 = vmatpush2.msra.mxu0 0.0
        %353 = vmatprep.subr.mxu0 0.0
        %354 = vmatpush2.msra.mxu0 0.0
        %355 = vmatprep.subr.mxu0 0.0
        %356 = vmatpush2.msra.mxu0 0.0
        %357 = vmatprep.subr.mxu0 0.0
        %358 = vmatpush2.msra.mxu0 0.0
        %359 = vmatprep.mubr.f32.mxu0 0.0
        %360 = vmatmul.mubr.f32.gmra.mxu0 %v289
        %v361 = vpop.f32.mrf.mxu0
        %v362 = vadd.f32 0.0, %v361
        %v363 = vpop.f32.mrf.mxu0
        %364 = vdwg.mxu0
        %366 = vrot.lane.b32.xlu0 %v362, 127
        %v367 = vpop.permute.xlu0 %366
        %v369 = vadd.f32 %v362, %v367
        %v370 = vxor.u32 %v369, 2147483648
        %v371 = vmul.f32 %v370, 1.442695
        %v372 = vpow.pop %v371
        %v373 = vadd.f32 %v372, 1.0
        %v374 = vrcp.pop %v373
        %v375 = vmul.f32 1.0, %v374
        %v376 = vadd.f32 %v375, 1.0
        %378 = vset.pattern.permute.xlu0 0
        %379 = vperm.xlu0 %378, %v376
        %v380 = vpop.permute.xlu0 %379
        %v382 = vunpack.c.l.s4 839922192
        %v383 = vunpack.c.0.s8 %v382
        %v384 = vlaneseq
        %v385 = vshrl.u32 %v384, 7
        %v386 = vsub.s32 %v383, %v385
        %v387 = vrot.slane %v380, %v386
        %v389 = vmul.f32 %v187, %v387
        %390 = vst [vmem:[%s186] sm:$0xff] %v389
        %s391 = sand.u32 %s96, 1
        %s392 = scalar_lea.sflag [#allocation4], %s391
        %s393 = sand.u32 %s96, 1
        %s394 = smul.addr %s393, 8
        %s395 = scalar_lea.vmem [#allocation5], %s394
        // Predicated region
        $region37: #{tpu_custom_call.1} parent=31 // pred_check
          %p396 = pneg %p106
        $region38: #{tpu_custom_call.1} parent=31 // pred_check_branch
          %398 = sbr.rel (%p396) target = $region40
        $region39: #{tpu_custom_call.1} parent=31 // pred_region
          %s400 = ssub.s32 128, 128
          %401 = vsyncadd %s392, %s400
          %s402 = smul.addr %s20, 2
          %s403 = smul.addr %s402, 64
          %s404 = scalar_lea.hbm %s3, %s403
          %s406 = sshll.u32 %s395, 4
          %s407 = int_to_ptr.vmem [resolvable:$true] %s406
          %409 = dma.vmem_to_hbm [thread:$0]  %s407, 128, %s404, %s392
        $region40: #{tpu_custom_call.1} parent=31 // pred_fallthru
          _
      $region32: #{tpu_custom_call.1} parent=5 // pred_fallthru
        _
      %p410 = scmp.le.s32.totalorder 2, %s15
      // Predicated region
      $region41: #{tpu_custom_call.1} parent=5 // pred_check
        %p411 = pneg %p410
      $region42: #{tpu_custom_call.1} parent=5 // pred_check_branch
        %413 = sbr.rel (%p411) target = $region44
      $region43: #{tpu_custom_call.1} parent=5 // pred_region
        %s414 = ssub.s32 %s15, 2
        // Predicated region
        $region45: #{tpu_custom_call.1} parent=43 // pred_check
          %p415 = pneg %p112
        $region46: #{tpu_custom_call.1} parent=43 // pred_check_branch
          %417 = sbr.rel (%p415) target = $region48
        $region47: #{tpu_custom_call.1} parent=43 // pred_region
          %s418 = sand.u32 %s97, 1
          %s419 = scalar_lea.sflag [#allocation4], %s418
          %s420 = sand.u32 %s97, 1
          %s421 = smul.addr %s420, 8
          %s422 = scalar_lea.vmem [#allocation5], %s421
          %423 = dma.done %s419, 128
        $region48: #{tpu_custom_call.1} parent=43 // pred_fallthru
          _
      $region44: #{tpu_custom_call.1} parent=5 // pred_fallthru
        _
    $region6: #{tpu_custom_call.1} parent=1 // loop_footer
      %s19 = sadd.s32 1, %s15
    $region7: #{tpu_custom_call.1} parent=1 // loop_footer_branch
      %14 = sbr.rel target = $region3
    $region8: #{tpu_custom_call.1} parent=1 // loop_exit
      _
    %424 = vsyncpa [#allocation3], 1
    %s425 = scalar_lea.sflag [#allocation3], 1
    %426 = vsyncpa %s425, 1
    %427 = vsyncpa [#allocation4], 1
    %s428 = scalar_lea.sflag [#allocation4], 1
    %429 = vsyncpa %s428, 1

</llo_original>
